<compile_context>
chip_gen: v7x
topology: tpu7x:2x2x1
jax: 0.10.0
libtpu: 0.0.40
codegen_flags: <defaults>
</compile_context>

<pallas_src>
import math

import jax
import jax.numpy as jnp
from jax.experimental import pallas as pl
from jax.experimental.pallas import tpu as pltpu


def build_pe_table(d_model: int, max_len: int) -> jnp.ndarray:
    """Reference sin/cos positional-encoding buffer, identical to the module __init__."""
    position = jnp.arange(max_len, dtype=jnp.float32)[:, None]                 # (max_len, 1)
    div_term = jnp.exp(
        jnp.arange(0, d_model, 2, dtype=jnp.float32) * (-(math.log(10000.0) / d_model))
    )                                                                          # (d_model/2,)
    pe = jnp.zeros((max_len, 1, d_model), dtype=jnp.float32)
    pe = pe.at[:, 0, 0::2].set(jnp.sin(position * div_term))
    pe = pe.at[:, 0, 1::2].set(jnp.cos(position * div_term))
    return pe


def _choose_tile_rows(rows: int, row_bytes: int, target_bytes: int = 1 << 20) -> int:
    """Largest multiple-of-8 divisor of `rows` giving ~<=1 MiB x-tiles and >=4 grid
    steps when the tensor is big enough (so double-buffering actually overlaps DMA).
    Falls back to a single full-extent block for tiny / awkward row counts."""
    target = max(8, min(target_bytes // max(row_bytes, 1), max(rows // 4, 8)))
    best = None
    for cand in range(8, min(rows, target) + 1, 8):
        if rows % cand == 0:
            best = cand
    return best if best is not None else rows


def _make_kernel(batch: int, d_model: int, tile_rows: int, p: float, training: bool):
    """Kernel body; dropout branch and all scalar constants are baked in statically."""
    neg_log_scale = -math.log(10000.0) / d_model
    use_dropout = training and p > 0.0
    inv_keep = 1.0 / (1.0 - p) if p < 1.0 else 0.0
    # Signed threshold: for bits uniform over int32, P(bits < thresh) == p.
    thresh = min(int(round(p * 2.0 ** 32)) - 2 ** 31, 2 ** 31 - 1)

    def kernel(*refs):
        if use_dropout:
            x_ref, bits_ref, o_ref = refs
        else:
            x_ref, o_ref = refs

        # ---- positional encoding for this tile, computed on-chip (no pe stream) ----
        # Column-dependent factors, hoisted to a (1, D) vector (no int div/mod: use
        # bit tricks so only cheap VPU ops are emitted).
        col = jax.lax.broadcasted_iota(jnp.int32, (1, d_model), 1)
        two_k = jnp.bitwise_and(col, -2)                                # 2 * (d // 2)
        inv_freq = jnp.exp(two_k.astype(jnp.float32) * neg_log_scale)   # (1, D)
        is_even = jnp.bitwise_and(col, 1) == 0                          # (1, D)

        # Absolute sequence position of every sublane row of this tile.
        pos = jax.lax.broadcasted_iota(jnp.int32, (tile_rows, 1), 0)
        pos = (pos + pl.program_id(0) * tile_rows).astype(jnp.float32)  # (ts, 1)

        angle = pos * inv_freq                                          # (ts, D)
        pe = jnp.where(is_even, jnp.sin(angle), jnp.cos(angle))         # (ts, D) f32

        # Broadcast over the batch along the lane axis: (ts, D) -> (ts, B*D).
        pe_wide = jnp.concatenate([pe] * batch, axis=-1) if batch > 1 else pe

        y = x_ref[...].astype(jnp.float32) + pe_wide                    # VPU add

        if use_dropout:
            if p >= 1.0:
                y = jnp.zeros_like(y)
            else:
                drop = bits_ref[...] < jnp.int32(thresh)                # 1 cmp / vreg
                y = jnp.where(drop, 0.0, y * inv_keep)

        o_ref[...] = y.astype(o_ref.dtype)

    return kernel


def positional_encoding(
    x: jnp.ndarray,
    *,
    p: float = 0.1,
    training: bool = False,
    rng: jax.Array | None = None,
    max_len: int = 5000,
    tile_rows: int | None = None,
) -> jnp.ndarray:
    """x: (S, B, D). Returns dropout(x + pe[:S], p) with the module's sin/cos pe."""
    S, B, D = x.shape
    assert S <= max_len, "sequence length exceeds max_len (same contract as the module)"
    assert S * B < (1 << 23), "position indices must stay exact in f32"

    lanes = B * D
    x2 = x.reshape(S, lanes)                      # free: contiguous row-major view

    if tile_rows is None:
        tile_rows = _choose_tile_rows(S, lanes * x.dtype.itemsize)
    assert S % tile_rows == 0
    grid = (S // tile_rows,)

    use_dropout = training and p > 0.0
    kernel = _make_kernel(B, D, tile_rows, float(p), bool(training))

    in_specs = [pl.BlockSpec((tile_rows, lanes), lambda i: (i, 0))]
    operands = [x2]
    if use_dropout:
        if rng is None:
            rng = jax.random.PRNGKey(0)
        bits = jax.lax.bitcast_convert_type(
            jax.random.bits(rng, (S, lanes), dtype=jnp.uint32), jnp.int32
        )
        in_specs.append(pl.BlockSpec((tile_rows, lanes), lambda i: (i, 0)))
        operands.append(bits)

    n = S * lanes
    cost = pl.CostEstimate(
        flops=3 * n,
        transcendentals=2 * S * D,                       # sin & cos per (pos, d)
        bytes_accessed=2 * n * x.dtype.itemsize + (4 * n if use_dropout else 0),
    )

    y2 = pl.pallas_call(
        kernel,
        out_shape=jax.ShapeDtypeStruct((S, lanes), x.dtype),
        grid=grid,
        in_specs=in_specs,
        out_specs=pl.BlockSpec((tile_rows, lanes), lambda i: (i, 0)),
        compiler_params=pltpu.CompilerParams(
            dimension_semantics=("parallel",),           # grid steps are independent
        ),
        cost_estimate=cost,
    )(*operands)

    return y2.reshape(S, B, D)


if __name__ == "__main__":
    # Small shapes consistent with the module: x is (seq_len, batch, d_model).
    S, B, D = 16, 2, 32
    MAX_LEN = 64

    key = jax.random.PRNGKey(0)
    kx, kdrop = jax.random.split(key)
    x = jax.random.normal(kx, (S, B, D), dtype=jnp.float32)

    # Pure-JAX reference (built the same way as the module's buffer).
    ref = x + build_pe_table(D, MAX_LEN)[:S]

    # Eval-mode forward (dropout is identity) -- deterministic, checkable.
    out = jax.block_until_ready(positional_encoding(x, p=0.1, training=False))
    assert out.shape == (S, B, D)
    assert jnp.allclose(out, ref, atol=1e-5, rtol=1e-5)

    # Training-mode forward: kept elements must equal ref / (1 - p); dropped are 0.
    p_train = 0.5
    out_tr = jax.block_until_ready(
        positional_encoding(x, p=p_train, training=True, rng=kdrop)
    )
    assert out_tr.shape == (S, B, D)
    kept = out_tr != 0.0
    assert jnp.allclose(
        jnp.where(kept, out_tr, 0.0),
        jnp.where(kept, ref / (1.0 - p_train), 0.0),
        atol=1e-4, rtol=1e-4,
    )

    print("KERNEL_OK")
</pallas_src>

<mosaic_0001>
module attributes {stable_mosaic.version = 11 : i64} {
  func.func @kernel(%arg0: i32, %arg1: memref<8x64xf32, #tpu.memory_space<vmem>>, %arg2: memref<8x64xf32, #tpu.memory_space<vmem>>) attributes {dimension_semantics = [#tpu.dimension_semantics<parallel>], iteration_bounds = array<i64: 2>, scalar_prefetch = 0 : i64, scratch_operands = 0 : i64, tpu.core_type = #tpu.core_type<tc>, window_params = [{transform_indices = @transform_0, window_bounds = array<i64: 8, 64>}, {transform_indices = @transform_1, window_bounds = array<i64: 8, 64>}]} {
    %0 = tpu.iota {dimensions = array<i32: 1>} : vector<1x32xi32>
    %c-2_i32 = arith.constant -2 : i32
    %1 = vector.broadcast %c-2_i32 : i32 to vector<1x32xi32>
    %2 = arith.andi %0, %1 : vector<1x32xi32>
    %3 = arith.sitofp %2 : vector<1x32xi32> to vector<1x32xf32>
    %cst = arith.constant -0.287823141 : f32
    %4 = vector.broadcast %cst : f32 to vector<1x32xf32>
    %5 = arith.mulf %3, %4 : vector<1x32xf32>
    %6 = math.exp %5 : vector<1x32xf32>
    %c1_i32 = arith.constant 1 : i32
    %7 = vector.broadcast %c1_i32 : i32 to vector<1x32xi32>
    %8 = arith.andi %0, %7 : vector<1x32xi32>
    %c0_i32 = arith.constant 0 : i32
    %9 = vector.broadcast %c0_i32 : i32 to vector<1x32xi32>
    %10 = arith.cmpi eq, %8, %9 : vector<1x32xi32>
    %11 = tpu.iota {dimensions = array<i32: 0>} : vector<8x1xi32>
    %c8_i32 = arith.constant 8 : i32
    %12 = arith.muli %arg0, %c8_i32 : i32
    %13 = vector.broadcast %12 : i32 to vector<8x1xi32>
    %14 = arith.addi %11, %13 : vector<8x1xi32>
    %15 = arith.sitofp %14 : vector<8x1xi32> to vector<8x1xf32>
    %16 = vector.broadcast %15 : vector<8x1xf32> to vector<8x32xf32>
    %17 = vector.broadcast %6 : vector<1x32xf32> to vector<8x32xf32>
    %18 = arith.mulf %16, %17 : vector<8x32xf32>
    %19 = math.sin %18 : vector<8x32xf32>
    %20 = math.cos %18 : vector<8x32xf32>
    %21 = vector.shape_cast %10 : vector<1x32xi1> to vector<1x32xi1>
    %22 = vector.broadcast %21 : vector<1x32xi1> to vector<8x32xi1>
    %23 = arith.select %22, %19, %20 : vector<8x32xi1>, vector<8x32xf32>
    %24 = tpu.concatenate %23, %23 in 1 : vector<8x32xf32>, vector<8x32xf32> -> vector<8x64xf32>
    %c0 = arith.constant 0 : index
    %c0_0 = arith.constant 0 : index
    %25 = vector.load %arg1[%c0, %c0_0] : memref<8x64xf32, #tpu.memory_space<vmem>>, vector<8x64xf32>
    %26 = arith.addf %25, %24 : vector<8x64xf32>
    %c0_1 = arith.constant 0 : index
    %c0_2 = arith.constant 0 : index
    %27 = vector.load %arg2[%c0_1, %c0_2] : memref<8x64xf32, #tpu.memory_space<vmem>>, vector<8x64xf32>
    tpu.vector_store %arg2[%c0_1, %c0_2], %26 {strides = array<i32>} : memref<8x64xf32, #tpu.memory_space<vmem>>, vector<8x64xf32>,
    return
  }
  func.func @transform_0(%arg0: i32) -> (i32, i32) {
    %c0_i32 = arith.constant 0 : i32
    %c0_i32_0 = arith.constant 0 : i32
    return %arg0, %c0_i32 : i32, i32
  }
  func.func @transform_1(%arg0: i32) -> (i32, i32) {
    %c0_i32 = arith.constant 0 : i32
    %c0_i32_0 = arith.constant 0 : i32
    return %arg0, %c0_i32 : i32, i32
  }
}

</mosaic_0001>

<llo_original>
// kernel: tpu_custom_call.1
$region0: #{tpu_custom_call.1}
  #allocation0 [shape = 'u32[]', space=smem, size = 0x4, offset = 0x4, fixed_abs, tag = 'smem constant byte address 0x4 - core index']
  #allocation1 [shape = 'u32[144,128]{1,0:T(1,128)}', space=vmem, size = 0x12000, scoped, tag = 'internal scratch']
  %s0 = inlined_call_operand.hbm [shape: f32[16,64], index: 0, kind: input, shape index: {}]
  %s1 = inlined_call_operand.hbm [shape: f32[16,64], index: 1, kind: output, shape index: {}]
  %s2 = sld [smem:[#allocation0]]
  $region41: #{tpu_custom_call.1} parent=0
    _
  %s4 = ssub.s32 1, %s2
  %s5 = scalar_select 0, %s4, %s2
  $region1: #{tpu_custom_call.1} parent=0
    #allocation2 [shape = 'u8[8192]{0}', space=vmem, size = 0x2000, scoped, tag = 'input window, operand 0']
    #allocation3 [shape = 's32[2]{0}', space=sflag, size = 0x8, scoped, tag = 'scoped memory for tpu_custom_call.1']
    #allocation4 [shape = 's32[2]{0}', space=sflag, size = 0x8, scoped, tag = 'scoped memory for tpu_custom_call.1']
    #allocation5 [shape = 'u8[8192]{0}', space=vmem, size = 0x2000, scoped, tag = 'output window, operand 0']
    %6 = vsyncpa [#allocation3], 0
    %s7 = scalar_lea.sflag [#allocation3], 1
    %8 = vsyncpa %s7, 0
    %9 = vsyncpa [#allocation4], 0
    %s10 = scalar_lea.sflag [#allocation4], 1
    %11 = vsyncpa %s10, 0
    loop: start=0, step=1, limit=4
    $region2: #{tpu_custom_call.1} parent=1 // loop_pre_header
      _
    $region3: #{tpu_custom_call.1} parent=1 // loop_header
      %s13 = sphi 0, %s17
      %p14 = scmp.ge.s32.totalorder %s13, 4
      %s23 = sphi 0, %s25
      %s26 = sphi 0, %s23
      %s27 = sphi 0, %s26
      %s43 = sphi 0, %s27
      %s49 = sphi 0, %s51
      %s52 = sphi 0, %s49
      %s53 = sphi 0, %s52
      %s69 = sphi 0, %s53
    $region4: #{tpu_custom_call.1} parent=1 // loop_header_branch
      %16 = sbr.rel (%p14) target = $region8
    $region5: #{tpu_custom_call.1} parent=1 // loop_body
      %s18 = ssub.s32 %s13, 1
      %s19 = ssub.s32 %s13, 2
      %s20 = sadd.s32 %s13, 1
      %s21 = ssub.s32 %s13, %s20
      %p22 = scmp.eq.s32.totalorder %s21, 0
      %s24 = sadd.s32 %s23, 1
      %s25 = scalar_select %p22, %s23, %s24
      %p28 = pneg %p22
      %p29 = scmp.eq.s32.totalorder %s13, 1
      %p30 = por %p28, %p29
      %p31 = scmp.ne.s32.totalorder %s23, %s26
      %p32 = scmp.eq.s32.totalorder %s13, 0
      %p33 = por %p31, %p32
      %p34 = scmp.ne.s32.totalorder %s23, %s26
      %p35 = scmp.eq.s32.totalorder %s18, 1
      %p36 = por %p34, %p35
      %p37 = scmp.ne.s32.totalorder %s26, %s27
      %p38 = scmp.eq.s32.totalorder %s18, 0
      %p39 = por %p37, %p38
      %p40 = scmp.ne.s32.totalorder %s26, %s27
      %p41 = scmp.eq.s32.totalorder %s19, 1
      %p42 = por %p40, %p41
      %p44 = scmp.ne.s32.totalorder %s27, %s43
      %p45 = scmp.eq.s32.totalorder %s19, 0
      %p46 = por %p44, %p45
      %s47 = ssub.s32 %s13, %s20
      %p48 = scmp.eq.s32.totalorder %s47, 0
      %s50 = sadd.s32 %s49, 1
      %s51 = scalar_select %p48, %s49, %s50
      %p54 = pneg %p48
      %p55 = scmp.eq.s32.totalorder %s13, 1
      %p56 = por %p54, %p55
      %p57 = scmp.ne.s32.totalorder %s49, %s52
      %p58 = scmp.eq.s32.totalorder %s13, 0
      %p59 = por %p57, %p58
      %p60 = scmp.ne.s32.totalorder %s49, %s52
      %p61 = scmp.eq.s32.totalorder %s18, 1
      %p62 = por %p60, %p61
      %p63 = scmp.ne.s32.totalorder %s52, %s53
      %p64 = scmp.eq.s32.totalorder %s18, 0
      %p65 = por %p63, %p64
      %p66 = scmp.ne.s32.totalorder %s52, %s53
      %p67 = scmp.eq.s32.totalorder %s19, 1
      %p68 = por %p66, %p67
      %p70 = scmp.ne.s32.totalorder %s53, %s69
      %p71 = scmp.eq.s32.totalorder %s19, 0
      %p72 = por %p70, %p71
      %p73 = scmp.le.s32.totalorder 1, %s13
      %p74 = scmp.lt.s32.totalorder %s13, 3
      %p75 = pnand %p73, %p74
      %p76 = pneg %p75
      // Predicated region
      $region9: #{tpu_custom_call.1} parent=5 // pred_check
        _
      $region10: #{tpu_custom_call.1} parent=5 // pred_check_branch
        %78 = sbr.rel (%p75) target = $region12
      $region11: #{tpu_custom_call.1} parent=5 // pred_region
        %s79 = ssub.s32 %s13, 1
      $region12: #{tpu_custom_call.1} parent=5 // pred_fallthru
        _
      %p80 = scmp.lt.s32.totalorder %s13, 2
      // Predicated region
      $region13: #{tpu_custom_call.1} parent=5 // pred_check
        %p81 = pneg %p80
      $region14: #{tpu_custom_call.1} parent=5 // pred_check_branch
        %83 = sbr.rel (%p81) target = $region16
      $region15: #{tpu_custom_call.1} parent=5 // pred_region
        // Predicated region
        $region17: #{tpu_custom_call.1} parent=15 // pred_check
          %p84 = pneg %p33
        $region18: #{tpu_custom_call.1} parent=15 // pred_check_branch
          %86 = sbr.rel (%p84) target = $region20
        $region19: #{tpu_custom_call.1} parent=15 // pred_region
          %s87 = sand.u32 %s23, 1
          %s88 = scalar_lea.sflag [#allocation3], %s87
          %s89 = sand.u32 %s23, 1
          %s90 = smul.addr %s89, 8
          %s91 = scalar_lea.vmem [#allocation2], %s90
          %s93 = ssub.s32 128, 128
          %94 = vsyncadd %s88, %s93
          %s95 = smul.addr %s13, 128
          %s96 = scalar_lea.hbm %s0, %s95
          %s98 = sshll.u32 %s91, 4
          %s99 = int_to_ptr.vmem [resolvable:$true] %s98
          %101 = dma.hbm_to_vmem [thread:$0]  %s96, 128, %s99, %s88
        $region20: #{tpu_custom_call.1} parent=15 // pred_fallthru
          _
      $region16: #{tpu_custom_call.1} parent=5 // pred_fallthru
        _
      %p102 = scmp.le.s32.totalorder 1, %s13
      %p103 = scmp.lt.s32.totalorder %s13, 3
      %p104 = pnand %p102, %p103
      %p105 = pneg %p104
      // Predicated region
      $region21: #{tpu_custom_call.1} parent=5 // pred_check
        _
      $region22: #{tpu_custom_call.1} parent=5 // pred_check_branch
        %107 = sbr.rel (%p104) target = $region24
      $region23: #{tpu_custom_call.1} parent=5 // pred_region
        %s108 = ssub.s32 %s13, 1
        %s109 = sand.u32 %s26, 1
        %s110 = scalar_lea.sflag [#allocation3], %s109
        %s111 = sand.u32 %s26, 1
        %s112 = smul.addr %s111, 8
        %s113 = scalar_lea.vmem [#allocation2], %s112
        // Predicated region
        $region25: #{tpu_custom_call.1} parent=23 // pred_check
          %p114 = pneg %p39
        $region26: #{tpu_custom_call.1} parent=23 // pred_check_branch
          %116 = sbr.rel (%p114) target = $region28
        $region27: #{tpu_custom_call.1} parent=23 // pred_region
          %117 = dma.done %s110, 128
        $region28: #{tpu_custom_call.1} parent=23 // pred_fallthru
          _
        %s118 = sand.u32 %s26, 1
        %s119 = scalar_lea.sflag [#allocation3], %s118
        %s120 = sand.u32 %s26, 1
        %s121 = smul.addr %s120, 8
        %s122 = scalar_lea.vmem [#allocation2], %s121
        %p123 = pneg %p39
        %p124 = pneg %p36
        %p125 = pneg %p65
        %p126 = pneg %p62
        %s127 = sand.u32 %s52, 1
        %s128 = scalar_lea.sflag [#allocation4], %s127
        %s129 = sand.u32 %s52, 1
        %s130 = smul.addr %s129, 8
        %s131 = scalar_lea.vmem [#allocation5], %s130
        %v132 = vlaneseq
        %v133 = vand.u32 %v132, 127
        %v134 = vand.u32 %v133, 4294967294
        %v135 = vcvt.s32.f32 %v134
        %v136 = vmul.f32 %v135, -0.28782314
        %v137 = vmul.f32 %v136, 1.442695
        %v138 = vpow.pop %v137
        %v139 = vand.u32 %v133, 1
        %vm140 = vcmp.eq.s32.totalorder %v139, 0
        %v141 = vlaneseq
        %v142 = vshrl.u32 %v141, 7
        %s143 = smul.u32 %s18, 8
        %v144 = vstv %s143
        %v145 = vadd.s32 %v142, %v144
        %v146 = vcvt.s32.f32 %v145
        %v147 = vmul.f32 %v146, %v138
        %v148 = vand.u32 2147483647, %v147
        %vm149 = vcmp.le.f32.partialorder %v148, 0.7853982
        %vm150 = vcmp.lt.s32.totalorder %v147, 0
        %v151 = vand.u32 %v147, 2139095040
        %v152 = vshrl.u32 %v151, 23
        %v153 = vsub.s32 %v152, 127
        %v154 = vand.u32 2147483647, %v147
        %v155 = vand.u32 %v154, 8388607
        %v156 = vor.u32 %v155, 8388608
        %v157 = vsub.s32 0, %v156
        %v158 = vadd.s32 %v153, 1
        %vm159 = vcmp.gt.s32.totalorder %v158, 0
        %v160 = vsel %vm159, %v158, 0
        %v161 = vshrl.u32 %v160, 5
        %v162 = vand.u32 %v160, 31
        %v163 = vsub.s32 32, %v162
        %v164 = vshrl.u32 683565275, %v163
        %v165 = vshll.u32 683565275, %v162
        %v166 = vshrl.u32 2475754826, %v163
        %v167 = vor.u32 %v165, %v166
        %v168 = vshll.u32 2475754826, %v162
        %v169 = vshrl.u32 2131351028, %v163
        %v170 = vor.u32 %v168, %v169
        %v171 = vshll.u32 2131351028, %v162
        %v172 = vshrl.u32 2102212464, %v163
        %v173 = vor.u32 %v171, %v172
        %v174 = vshll.u32 2102212464, %v162
        %v175 = vshrl.u32 920167782, %v163
        %v176 = vor.u32 %v174, %v175
        %v177 = vshll.u32 920167782, %v162
        %v178 = vshrl.u32 1326507024, %v163
        %v179 = vor.u32 %v177, %v178
        %vm180 = vcmp.lt.s32.totalorder %v161, 1
        %vm181 = vcmp.lt.s32.totalorder %v161, 2
        %vm182 = vcmp.lt.s32.totalorder %v161, 3
        %vm183 = vcmp.lt.s32.totalorder %v161, 4
        %v184 = vsel %vm180, %v164, %v167
        %v185 = vsel %vm183, %v173, 2102212464
        %v186 = vsel %vm182, %v170, %v185
        %v187 = vsel %vm181, %v184, %v186
        %v188 = vsel %vm180, %v167, %v170
        %v189 = vsel %vm183, %v176, 920167782
        %v190 = vsel %vm182, %v173, %v189
        %v191 = vsel %vm181, %v188, %v190
        %v192 = vsel %vm180, %v170, %v173
        %v193 = vsel %vm183, %v179, 1326507024
        %v194 = vsel %vm182, %v176, %v193
        %v195 = vsel %vm181, %v192, %v194
        %v196 = vshll.u32 %v156, 8
        %v197 = vmul.u32.u64.compose %v196, %v195
        %v198 = vextract.low.u32 %v197
        %v199 = vextract.high.u32 %v197
        %v200 = vmul.u32.u64.compose %v196, %v191
        %v201 = vextract.low.u32 %v200
        %v202 = vextract.high.u32 %v200
        %v203 = vmul.u32 %v196, %v187
        %v204 = vadd.s32 %v199, %v201
        %vm205 = vc.u32 %v199, %v201
        %v206 = vadd.s32 %v202, 1
        %v207 = vsel %vm205, %v206, %v202
        %v208 = vadd.s32 %v203, %v207
        %v209 = vadd.s32 %v208, 536870912
        %v210 = vshrl.u32 %v209, 30
        %v211 = vshll.u32 %v210, 30
        %v212 = vsub.s32 %v208, %v211
        %vm213 = vcmp.lt.s32.totalorder %v212, 0
        %v214 = vsub.s32 0, %v212
        %v215 = vsel %vm213, %v214, %v212
        %v216 = vclz %v215
        %v217 = vsub.s32 %v216, 2
        %vm218 = vcmp.gt.s32.totalorder 0, %v217
        %v219 = vsel %vm218, 0, %v217
        %v220 = vsub.s32 32, %v219
        %v221 = vshll.u32 %v212, %v219
        %v222 = vshrl.u32 %v204, %v220
        %v223 = vor.u32 %v221, %v222
        %v224 = vsub.s32 4294967266, %v219
        %v225 = vadd.s32 %v224, 127
        %v226 = vshll.u32 %v225, 23
        %v227 = vor.u32 4788187, %v226
        %v228 = vand.u32 2147483647, %v227
        %v230 = vcvt.s32.f32 %v223
        %v231 = vmul.f32 %v230, %v228
        %v232 = vxor.u32 %v231, 2147483648
        %v233 = vsel %vm150, %v232, %v231
        %v234 = vsub.s32 4, %v210
        %v235 = vsel %vm150, %v234, %v210
        %v236 = vsel %vm149, %v147, %v233
        %v237 = vsel %vm149, 0, %v235
        %v238 = vcosq.f32.pop %v236
        %v239 = vsinq.f32.pop %v236
        %vm240 = vweird.f32 %v147
        %v241 = vadd.s32 %v237, 3
        %v242 = vand.u32 %v241, 3
        %vm243 = vcmp.lt.s32.totalorder %v242, 2
        %vm244 = vcmp.eq.s32.totalorder %v242, 0
        %v245 = vxor.u32 %v239, 2147483648
        %v246 = vsel %vm244, %v238, %v245
        %vm247 = vcmp.eq.s32.totalorder %v242, 2
        %v248 = vxor.u32 %v238, 2147483648
        %v249 = vsel %vm247, %v248, %v239
        %v250 = vsel %vm243, %v246, %v249
        %v251 = vsel %vm240, nan, %v250
        %v252 = vand.u32 2147483647, %v147
        %vm253 = vcmp.le.f32.partialorder %v252, 0.7853982
        %vm254 = vcmp.lt.s32.totalorder %v147, 0
        %v255 = vand.u32 %v147, 2139095040
        %v256 = vshrl.u32 %v255, 23
        %v257 = vsub.s32 %v256, 127
        %v258 = vand.u32 2147483647, %v147
        %v259 = vand.u32 %v258, 8388607
        %v260 = vor.u32 %v259, 8388608
        %v261 = vsub.s32 0, %v260
        %v262 = vadd.s32 %v257, 1
        %vm263 = vcmp.gt.s32.totalorder %v262, 0
        %v264 = vsel %vm263, %v262, 0
        %v265 = vshrl.u32 %v264, 5
        %v266 = vand.u32 %v264, 31
        %v267 = vsub.s32 32, %v266
        %v268 = vshrl.u32 683565275, %v267
        %v269 = vshll.u32 683565275, %v266
        %v270 = vshrl.u32 2475754826, %v267
        %v271 = vor.u32 %v269, %v270
        %v272 = vshll.u32 2475754826, %v266
        %v273 = vshrl.u32 2131351028, %v267
        %v274 = vor.u32 %v272, %v273
        %v275 = vshll.u32 2131351028, %v266
        %v276 = vshrl.u32 2102212464, %v267
        %v277 = vor.u32 %v275, %v276
        %v278 = vshll.u32 2102212464, %v266
        %v279 = vshrl.u32 920167782, %v267
        %v280 = vor.u32 %v278, %v279
        %v281 = vshll.u32 920167782, %v266
        %v282 = vshrl.u32 1326507024, %v267
        %v283 = vor.u32 %v281, %v282
        %vm284 = vcmp.lt.s32.totalorder %v265, 1
        %vm285 = vcmp.lt.s32.totalorder %v265, 2
        %vm286 = vcmp.lt.s32.totalorder %v265, 3
        %vm287 = vcmp.lt.s32.totalorder %v265, 4
        %v288 = vsel %vm284, %v268, %v271
        %v289 = vsel %vm287, %v277, 2102212464
        %v290 = vsel %vm286, %v274, %v289
        %v291 = vsel %vm285, %v288, %v290
        %v292 = vsel %vm284, %v271, %v274
        %v293 = vsel %vm287, %v280, 920167782
        %v294 = vsel %vm286, %v277, %v293
        %v295 = vsel %vm285, %v292, %v294
        %v296 = vsel %vm284, %v274, %v277
        %v297 = vsel %vm287, %v283, 1326507024
        %v298 = vsel %vm286, %v280, %v297
        %v299 = vsel %vm285, %v296, %v298
        %v300 = vshll.u32 %v260, 8
        %v301 = vmul.u32.u64.compose %v300, %v299
        %v302 = vextract.low.u32 %v301
        %v303 = vextract.high.u32 %v301
        %v304 = vmul.u32.u64.compose %v300, %v295
        %v305 = vextract.low.u32 %v304
        %v306 = vextract.high.u32 %v304
        %v307 = vmul.u32 %v300, %v291
        %v308 = vadd.s32 %v303, %v305
        %vm309 = vc.u32 %v303, %v305
        %v310 = vadd.s32 %v306, 1
        %v311 = vsel %vm309, %v310, %v306
        %v312 = vadd.s32 %v307, %v311
        %v313 = vadd.s32 %v312, 536870912
        %v314 = vshrl.u32 %v313, 30
        %v315 = vshll.u32 %v314, 30
        %v316 = vsub.s32 %v312, %v315
        %vm317 = vcmp.lt.s32.totalorder %v316, 0
        %v318 = vsub.s32 0, %v316
        %v319 = vsel %vm317, %v318, %v316
        %v320 = vclz %v319
        %v321 = vsub.s32 %v320, 2
        %vm322 = vcmp.gt.s32.totalorder 0, %v321
        %v323 = vsel %vm322, 0, %v321
        %v324 = vsub.s32 32, %v323
        %v325 = vshll.u32 %v316, %v323
        %v326 = vshrl.u32 %v308, %v324
        %v327 = vor.u32 %v325, %v326
        %v328 = vsub.s32 4294967266, %v323
        %v329 = vadd.s32 %v328, 127
        %v330 = vshll.u32 %v329, 23
        %v331 = vor.u32 4788187, %v330
        %v332 = vand.u32 2147483647, %v331
        %v334 = vcvt.s32.f32 %v327
        %v335 = vmul.f32 %v334, %v332
        %v336 = vxor.u32 %v335, 2147483648
        %v337 = vsel %vm254, %v336, %v335
        %v338 = vsub.s32 4, %v314
        %v339 = vsel %vm254, %v338, %v314
        %v340 = vsel %vm253, %v147, %v337
        %v341 = vsel %vm253, 0, %v339
        %v342 = vcosq.f32.pop %v340
        %v343 = vsinq.f32.pop %v340
        %vm344 = vweird.f32 %v147
        %v345 = vand.u32 %v341, 3
        %vm346 = vcmp.lt.s32.totalorder %v345, 2
        %vm347 = vcmp.eq.s32.totalorder %v345, 0
        %v348 = vxor.u32 %v343, 2147483648
        %v349 = vsel %vm347, %v342, %v348
        %vm350 = vcmp.eq.s32.totalorder %v345, 2
        %v351 = vxor.u32 %v342, 2147483648
        %v352 = vsel %vm350, %v351, %v343
        %v353 = vsel %vm346, %v349, %v352
        %v354 = vsel %vm344, nan, %v353
        %v355 = vsel %vm140, 1, 0
        %vm356 = vcmp.eq.s32.totalorder %v355, 1
        %v357 = vsel %vm356, %v251, %v354
        %359 = vrot.lane.b32.xlu0 %v357, 32
        %v360 = vpop.permute.xlu0 %359
        %vm362 = vcmask 261120
        %v363 = vsel %vm362, %v357, %v360
        %v364 = vld [vmem:[%s113] sm:$0xff]
        %v365 = vadd.f32 %v364, %v363
        %vm366 = vcmask 523264
        %367 = vst.msk [vmem:[%s131] sm:$0xff] %vm366, %v365
        %s368 = sand.u32 %s52, 1
        %s369 = scalar_lea.sflag [#allocation4], %s368
        %s370 = sand.u32 %s52, 1
        %s371 = smul.addr %s370, 8
        %s372 = scalar_lea.vmem [#allocation5], %s371
        // Predicated region
        $region29: #{tpu_custom_call.1} parent=23 // pred_check
          %p373 = pneg %p62
        $region30: #{tpu_custom_call.1} parent=23 // pred_check_branch
          %375 = sbr.rel (%p373) target = $region32
        $region31: #{tpu_custom_call.1} parent=23 // pred_region
          %s377 = ssub.s32 128, 128
          %378 = vsyncadd %s369, %s377
          %s379 = smul.addr %s18, 128
          %s380 = scalar_lea.hbm %s1, %s379
          %s382 = sshll.u32 %s372, 4
          %s383 = int_to_ptr.vmem [resolvable:$true] %s382
          %385 = dma.vmem_to_hbm [thread:$0]  %s383, 128, %s380, %s369
        $region32: #{tpu_custom_call.1} parent=23 // pred_fallthru
          _
      $region24: #{tpu_custom_call.1} parent=5 // pred_fallthru
        _
      %p386 = scmp.le.s32.totalorder 2, %s13
      // Predicated region
      $region33: #{tpu_custom_call.1} parent=5 // pred_check
        %p387 = pneg %p386
      $region34: #{tpu_custom_call.1} parent=5 // pred_check_branch
        %389 = sbr.rel (%p387) target = $region36
      $region35: #{tpu_custom_call.1} parent=5 // pred_region
        %s390 = ssub.s32 %s13, 2
        // Predicated region
        $region37: #{tpu_custom_call.1} parent=35 // pred_check
          %p391 = pneg %p68
        $region38: #{tpu_custom_call.1} parent=35 // pred_check_branch
          %393 = sbr.rel (%p391) target = $region40
        $region39: #{tpu_custom_call.1} parent=35 // pred_region
          %s394 = sand.u32 %s53, 1
          %s395 = scalar_lea.sflag [#allocation4], %s394
          %s396 = sand.u32 %s53, 1
          %s397 = smul.addr %s396, 8
          %s398 = scalar_lea.vmem [#allocation5], %s397
          %399 = dma.done %s395, 128
        $region40: #{tpu_custom_call.1} parent=35 // pred_fallthru
          _
      $region36: #{tpu_custom_call.1} parent=5 // pred_fallthru
        _
    $region6: #{tpu_custom_call.1} parent=1 // loop_footer
      %s17 = sadd.s32 1, %s13
    $region7: #{tpu_custom_call.1} parent=1 // loop_footer_branch
      %12 = sbr.rel target = $region3
    $region8: #{tpu_custom_call.1} parent=1 // loop_exit
      _
    %400 = vsyncpa [#allocation3], 1
    %s401 = scalar_lea.sflag [#allocation3], 1
    %402 = vsyncpa %s401, 1
    %403 = vsyncpa [#allocation4], 1
    %s404 = scalar_lea.sflag [#allocation4], 1
    %405 = vsyncpa %s404, 1

</llo_original>
